<compile_context>
chip_gen: v7x
topology: tpu7x:2x2x1
jax: 0.10.0
libtpu: 0.0.40
codegen_flags: <defaults>
</compile_context>

<pallas_src>
import functools

import jax
import jax.numpy as jnp
from jax.experimental import pallas as pl
from jax.experimental.pallas import tpu as pltpu

FULL_DIM = 128   # full-order state dimension
HIDDEN = 64      # encoder/decoder hidden width
LATENT = 8       # latent dimension (folded away inside the kernel)
TILE_B = 256     # max rows per grid step (full MXU pass on v6e/v7x)


def ae_kernel(x_ref,
              w1_ref, b1_ref,     # encoder L1:       (128, 64) bf16, (1, 64) f32
              w23_ref, b23_ref,   # folded enc2+dec1: (64, 64)  bf16, (1, 64) f32
              w4_ref, b4_ref,     # decoder L2:       (64, 128) bf16, (1, 128) f32
              o_ref):
    # MXU inputs are bf16 with f32 accumulation; bias add + tanh stay f32.
    x = x_ref[...]
    h1 = jnp.tanh(
        jnp.dot(x.astype(jnp.bfloat16), w1_ref[...],
                preferred_element_type=jnp.float32) + b1_ref[...])
    h2 = jnp.tanh(
        jnp.dot(h1.astype(jnp.bfloat16), w23_ref[...],
                preferred_element_type=jnp.float32) + b23_ref[...])
    x_hat = (
        jnp.dot(h2.astype(jnp.bfloat16), w4_ref[...],
                preferred_element_type=jnp.float32) + b4_ref[...])
    o_ref[...] = x_hat.astype(o_ref.dtype)


def prepare_params(p):
    """Fold encoder L2 + decoder L1 (no nonlinearity in between) and cast
    weights to bf16 for the MXU. Biases stay f32 (added post-accumulate)."""
    w23 = p["w2"] @ p["w3"]                 # (64, 8) @ (8, 64) -> (64, 64)
    b23 = p["b2"] @ p["w3"] + p["b3"]       # (1, 64)
    bf = jnp.bfloat16
    return dict(
        w1=p["w1"].astype(bf), b1=p["b1"],
        w23=w23.astype(bf),   b23=b23,
        w4=p["w4"].astype(bf), b4=p["b4"],
    )


@functools.partial(jax.jit, static_argnames=("tile_b",))
def _ae_forward_padded(x, fused, tile_b):
    """x: (Bp, FULL_DIM) f32 with Bp a multiple of tile_b."""
    Bp = x.shape[0]
    nb = Bp // tile_b

    w1, b1 = fused["w1"], fused["b1"]
    w23, b23 = fused["w23"], fused["b23"]
    w4, b4 = fused["w4"], fused["b4"]

    # Activation tiles march over the batch axis (double-buffered DMA);
    # weights/biases keep a constant block index -> VMEM-resident.
    act_spec = pl.BlockSpec((tile_b, FULL_DIM), lambda i: (i, 0))

    def resident(shape):
        return pl.BlockSpec(shape, lambda i: (0,) * len(shape))

    cost = pl.CostEstimate(
        flops=2 * Bp * (FULL_DIM * HIDDEN + HIDDEN * HIDDEN + HIDDEN * FULL_DIM),
        transcendentals=2 * Bp * HIDDEN,
        bytes_accessed=(2 * Bp * FULL_DIM * 4                      # x in + x_hat out (f32)
                        + (w1.size + w23.size + w4.size) * 2       # bf16 weights
                        + (b1.size + b23.size + b4.size) * 4),     # f32 biases
    )

    return pl.pallas_call(
        ae_kernel,
        out_shape=jax.ShapeDtypeStruct((Bp, FULL_DIM), jnp.float32),
        grid_spec=pltpu.PrefetchScalarGridSpec(
            num_scalar_prefetch=0,
            grid=(nb,),
            in_specs=[
                act_spec,
                resident(w1.shape), resident(b1.shape),
                resident(w23.shape), resident(b23.shape),
                resident(w4.shape), resident(b4.shape),
            ],
            out_specs=act_spec,
        ),
        compiler_params=pltpu.CompilerParams(
            dimension_semantics=("parallel",),   # batch tiles shard across TCs (v7x)
        ),
        cost_estimate=cost,
    )(x, w1, b1, w23, b23, w4, b4)


def ae_forward(x, fused, max_tile_b=TILE_B):
    """x: (B, FULL_DIM) float32; fused: dict from prepare_params()."""
    B = x.shape[0]
    b8 = ((B + 7) // 8) * 8                 # sublane granularity
    tile_b = min(max_tile_b, b8)            # small batches -> single small tile
    nb = (b8 + tile_b - 1) // tile_b
    Bp = nb * tile_b
    if Bp != B:
        x = jnp.pad(x, ((0, Bp - B), (0, 0)))
    out = _ae_forward_padded(x, fused, tile_b)
    return out[:B]


def init_params(key):
    """Deterministic PyTorch-nn.Linear-style init (uniform(-1/sqrt(fan_in), +))."""
    def linear(key, fan_in, fan_out):
        kw, kb = jax.random.split(key)
        bound = 1.0 / jnp.sqrt(fan_in)
        w = jax.random.uniform(kw, (fan_in, fan_out), jnp.float32, -bound, bound)
        b = jax.random.uniform(kb, (1, fan_out), jnp.float32, -bound, bound)
        return w, b

    k1, k2, k3, k4 = jax.random.split(key, 4)
    w1, b1 = linear(k1, FULL_DIM, HIDDEN)   # encoder L1
    w2, b2 = linear(k2, HIDDEN, LATENT)     # encoder L2
    w3, b3 = linear(k3, LATENT, HIDDEN)     # decoder L1
    w4, b4 = linear(k4, HIDDEN, FULL_DIM)   # decoder L2
    return dict(w1=w1, b1=b1, w2=w2, b2=b2, w3=w3, b3=b3, w4=w4, b4=b4)


def ae_reference_f32(x, p):
    """Plain-JAX f32 reference of the original (unfolded) forward pass."""
    h1 = jnp.tanh(x @ p["w1"] + p["b1"])
    z = h1 @ p["w2"] + p["b2"]
    h2 = jnp.tanh(z @ p["w3"] + p["b3"])
    return h2 @ p["w4"] + p["b4"]


def ae_reference_matched(x, fp):
    """Reference with the same numerics as the kernel (folded + bf16-in/f32-acc)."""
    bf, f32 = jnp.bfloat16, jnp.float32
    h1 = jnp.tanh(jnp.dot(x.astype(bf), fp["w1"], preferred_element_type=f32) + fp["b1"])
    h2 = jnp.tanh(jnp.dot(h1.astype(bf), fp["w23"], preferred_element_type=f32) + fp["b23"])
    return jnp.dot(h2.astype(bf), fp["w4"], preferred_element_type=f32) + fp["b4"]


if __name__ == "__main__":
    key = jax.random.PRNGKey(0)
    k_params, k_x = jax.random.split(key)

    params = init_params(k_params)
    fused = prepare_params(params)

    # Small, module-consistent example: a batch of 8 full-order states of dim 128.
    batch = 8
    x = jax.random.normal(k_x, (batch, FULL_DIM), jnp.float32)

    out = jax.block_until_ready(ae_forward(x, fused))
    assert out.shape == (batch, FULL_DIM)

    ref_match = ae_reference_matched(x, fused)   # same folded/bf16 numerics
    ref_f32 = ae_reference_f32(x, params)        # original module semantics
    assert jnp.allclose(out, ref_match, atol=5e-3, rtol=5e-3)
    assert jnp.allclose(out, ref_f32, atol=5e-2, rtol=5e-2)

    print("KERNEL_OK")
</pallas_src>

<mosaic_0001>
module attributes {stable_mosaic.version = 11 : i64} {
  func.func @ae_kernel(%arg0: i32, %arg1: memref<8x128xf32, #tpu.memory_space<vmem>>, %arg2: memref<128x64xbf16, #tpu.memory_space<vmem>>, %arg3: memref<1x64xf32, #tpu.memory_space<vmem>>, %arg4: memref<64x64xbf16, #tpu.memory_space<vmem>>, %arg5: memref<1x64xf32, #tpu.memory_space<vmem>>, %arg6: memref<64x128xbf16, #tpu.memory_space<vmem>>, %arg7: memref<1x128xf32, #tpu.memory_space<vmem>>, %arg8: memref<8x128xf32, #tpu.memory_space<vmem>>) attributes {dimension_semantics = [#tpu.dimension_semantics<parallel>], iteration_bounds = array<i64: 1>, scalar_prefetch = 0 : i64, scratch_operands = 0 : i64, tpu.core_type = #tpu.core_type<tc>, window_params = [{transform_indices = @transform_0, window_bounds = array<i64: 8, 128>}, {pipeline_mode = #tpu.pipeline_mode<synchronous>, transform_indices = @transform_1, window_bounds = array<i64: 128, 64>}, {pipeline_mode = #tpu.pipeline_mode<synchronous>, transform_indices = @transform_2, window_bounds = array<i64: 1, 64>}, {pipeline_mode = #tpu.pipeline_mode<synchronous>, transform_indices = @transform_3, window_bounds = array<i64: 64, 64>}, {pipeline_mode = #tpu.pipeline_mode<synchronous>, transform_indices = @transform_4, window_bounds = array<i64: 1, 64>}, {pipeline_mode = #tpu.pipeline_mode<synchronous>, transform_indices = @transform_5, window_bounds = array<i64: 64, 128>}, {pipeline_mode = #tpu.pipeline_mode<synchronous>, transform_indices = @transform_6, window_bounds = array<i64: 1, 128>}, {transform_indices = @transform_7, window_bounds = array<i64: 8, 128>}]} {
    %c0 = arith.constant 0 : index
    %c0_0 = arith.constant 0 : index
    %0 = vector.load %arg1[%c0, %c0_0] : memref<8x128xf32, #tpu.memory_space<vmem>>, vector<8x128xf32>
    %1 = arith.truncf %0 : vector<8x128xf32> to vector<8x128xbf16>
    %c0_1 = arith.constant 0 : index
    %c0_2 = arith.constant 0 : index
    %2 = vector.load %arg2[%c0_1, %c0_2] : memref<128x64xbf16, #tpu.memory_space<vmem>>, vector<128x64xbf16>
    %cst = arith.constant dense<0.000000e+00> : vector<8x64xf32>
    %3 = tpu.matmul %1, %2, %cst {dimension_numbers = #tpu.dot_dimension_numbers<[1], [0], [0], [1], [0, 0, 1, 1], [], []>} : vector<8x128xbf16>, vector<128x64xbf16>, vector<8x64xf32> -> vector<8x64xf32>
    %c0_3 = arith.constant 0 : index
    %c0_4 = arith.constant 0 : index
    %4 = vector.load %arg3[%c0_3, %c0_4] : memref<1x64xf32, #tpu.memory_space<vmem>>, vector<1x64xf32>
    %5 = vector.broadcast %4 : vector<1x64xf32> to vector<8x64xf32>
    %6 = arith.addf %3, %5 : vector<8x64xf32>
    %7 = math.tanh %6 : vector<8x64xf32>
    %8 = arith.truncf %7 : vector<8x64xf32> to vector<8x64xbf16>
    %c0_5 = arith.constant 0 : index
    %c0_6 = arith.constant 0 : index
    %9 = vector.load %arg4[%c0_5, %c0_6] : memref<64x64xbf16, #tpu.memory_space<vmem>>, vector<64x64xbf16>
    %cst_7 = arith.constant dense<0.000000e+00> : vector<8x64xf32>
    %10 = tpu.matmul %8, %9, %cst_7 {dimension_numbers = #tpu.dot_dimension_numbers<[1], [0], [0], [1], [0, 0, 1, 1], [], []>} : vector<8x64xbf16>, vector<64x64xbf16>, vector<8x64xf32> -> vector<8x64xf32>
    %c0_8 = arith.constant 0 : index
    %c0_9 = arith.constant 0 : index
    %11 = vector.load %arg5[%c0_8, %c0_9] : memref<1x64xf32, #tpu.memory_space<vmem>>, vector<1x64xf32>
    %12 = vector.broadcast %11 : vector<1x64xf32> to vector<8x64xf32>
    %13 = arith.addf %10, %12 : vector<8x64xf32>
    %14 = math.tanh %13 : vector<8x64xf32>
    %15 = arith.truncf %14 : vector<8x64xf32> to vector<8x64xbf16>
    %c0_10 = arith.constant 0 : index
    %c0_11 = arith.constant 0 : index
    %16 = vector.load %arg6[%c0_10, %c0_11] : memref<64x128xbf16, #tpu.memory_space<vmem>>, vector<64x128xbf16>
    %cst_12 = arith.constant dense<0.000000e+00> : vector<8x128xf32>
    %17 = tpu.matmul %15, %16, %cst_12 {dimension_numbers = #tpu.dot_dimension_numbers<[1], [0], [0], [1], [0, 0, 1, 1], [], []>} : vector<8x64xbf16>, vector<64x128xbf16>, vector<8x128xf32> -> vector<8x128xf32>
    %c0_13 = arith.constant 0 : index
    %c0_14 = arith.constant 0 : index
    %18 = vector.load %arg7[%c0_13, %c0_14] : memref<1x128xf32, #tpu.memory_space<vmem>>, vector<1x128xf32>
    %19 = vector.broadcast %18 : vector<1x128xf32> to vector<8x128xf32>
    %20 = arith.addf %17, %19 : vector<8x128xf32>
    %c0_15 = arith.constant 0 : index
    %c0_16 = arith.constant 0 : index
    %21 = vector.load %arg8[%c0_15, %c0_16] : memref<8x128xf32, #tpu.memory_space<vmem>>, vector<8x128xf32>
    tpu.vector_store %arg8[%c0_15, %c0_16], %20 {strides = array<i32>} : memref<8x128xf32, #tpu.memory_space<vmem>>, vector<8x128xf32>,
    return
  }
  func.func @transform_0(%arg0: i32) -> (i32, i32) {
    %c0_i32 = arith.constant 0 : i32
    %c0_i32_0 = arith.constant 0 : i32
    return %arg0, %c0_i32 : i32, i32
  }
  func.func @transform_1(%arg0: i32) -> (i32, i32) {
    %c0_i32 = arith.constant 0 : i32
    %c0_i32_0 = arith.constant 0 : i32
    %c0_i32_1 = arith.constant 0 : i32
    return %c0_i32, %c0_i32_0 : i32, i32
  }
  func.func @transform_2(%arg0: i32) -> (i32, i32) {
    %c0_i32 = arith.constant 0 : i32
    %c0_i32_0 = arith.constant 0 : i32
    %c0_i32_1 = arith.constant 0 : i32
    return %c0_i32, %c0_i32_0 : i32, i32
  }
  func.func @transform_3(%arg0: i32) -> (i32, i32) {
    %c0_i32 = arith.constant 0 : i32
    %c0_i32_0 = arith.constant 0 : i32
    %c0_i32_1 = arith.constant 0 : i32
    return %c0_i32, %c0_i32_0 : i32, i32
  }
  func.func @transform_4(%arg0: i32) -> (i32, i32) {
    %c0_i32 = arith.constant 0 : i32
    %c0_i32_0 = arith.constant 0 : i32
    %c0_i32_1 = arith.constant 0 : i32
    return %c0_i32, %c0_i32_0 : i32, i32
  }
  func.func @transform_5(%arg0: i32) -> (i32, i32) {
    %c0_i32 = arith.constant 0 : i32
    %c0_i32_0 = arith.constant 0 : i32
    %c0_i32_1 = arith.constant 0 : i32
    return %c0_i32, %c0_i32_0 : i32, i32
  }
  func.func @transform_6(%arg0: i32) -> (i32, i32) {
    %c0_i32 = arith.constant 0 : i32
    %c0_i32_0 = arith.constant 0 : i32
    %c0_i32_1 = arith.constant 0 : i32
    return %c0_i32, %c0_i32_0 : i32, i32
  }
  func.func @transform_7(%arg0: i32) -> (i32, i32) {
    %c0_i32 = arith.constant 0 : i32
    %c0_i32_0 = arith.constant 0 : i32
    return %arg0, %c0_i32 : i32, i32
  }
}

</mosaic_0001>

<llo_original>
// kernel: _ae_forward_padded.1
$region0: #{_ae_forward_padded.1}
  #allocation0 [shape = 'u32[]', space=smem, size = 0x4, offset = 0x4, fixed_abs, tag = 'smem constant byte address 0x4 - core index']
  #allocation1 [shape = 'u32[144,128]{1,0:T(1,128)}', space=vmem, size = 0x12000, scoped, tag = 'internal scratch']
  %s0 = inlined_call_operand.vmem [shape: f32[8,128], index: 0, kind: input, shape index: {}]
  %s1 = inlined_call_operand.vmem [shape: bf16[128,64], index: 1, kind: input, shape index: {}]
  %s2 = inlined_call_operand.vmem [shape: f32[1,64], index: 2, kind: input, shape index: {}]
  %s3 = inlined_call_operand.vmem [shape: bf16[64,64], index: 3, kind: input, shape index: {}]
  %s4 = inlined_call_operand.vmem [shape: f32[1,64], index: 4, kind: input, shape index: {}]
  %s5 = inlined_call_operand.vmem [shape: bf16[64,128], index: 5, kind: input, shape index: {}]
  %s6 = inlined_call_operand.vmem [shape: f32[1,128], index: 6, kind: input, shape index: {}]
  %s7 = inlined_call_operand.hbm [shape: f32[8,128], index: 7, kind: output, shape index: {}]
  %s8 = sld [smem:[#allocation0]]
  $region38: #{_ae_forward_padded.1} parent=0
    _
  %s10 = ssub.s32 1, %s8
  %s11 = scalar_select 0, %s10, %s8
  $region1: #{_ae_forward_padded.1} parent=0
    #allocation2 [shape = 'u8[4096]{0}', space=vmem, size = 0x1000, scoped, tag = 'output window, operand 0, single buffered']
    #allocation3 [shape = 's32[1]{0}', space=sflag, size = 0x4, scoped, tag = 'scoped memory for _ae_forward_padded.1']
    %12 = vsyncpa [#allocation3], 0
    // Predicated region
    $region2: #{_ae_forward_padded.1} parent=1 // pred_check
      _
    $region3: #{_ae_forward_padded.1} parent=1 // pred_check_branch
      %14 = sbr.rel (0) target = $region5
    $region4: #{_ae_forward_padded.1} parent=1 // pred_region
      _
    $region5: #{_ae_forward_padded.1} parent=1 // pred_fallthru
      _
    // Predicated region
    $region6: #{_ae_forward_padded.1} parent=1 // pred_check
      _
    $region7: #{_ae_forward_padded.1} parent=1 // pred_check_branch
      %16 = sbr.rel (0) target = $region9
    $region8: #{_ae_forward_padded.1} parent=1 // pred_region
      _
    $region9: #{_ae_forward_padded.1} parent=1 // pred_fallthru
      _
    // Predicated region
    $region10: #{_ae_forward_padded.1} parent=1 // pred_check
      _
    $region11: #{_ae_forward_padded.1} parent=1 // pred_check_branch
      %18 = sbr.rel (0) target = $region13
    $region12: #{_ae_forward_padded.1} parent=1 // pred_region
      _
    $region13: #{_ae_forward_padded.1} parent=1 // pred_fallthru
      _
    // Predicated region
    $region14: #{_ae_forward_padded.1} parent=1 // pred_check
      _
    $region15: #{_ae_forward_padded.1} parent=1 // pred_check_branch
      %20 = sbr.rel (0) target = $region17
    $region16: #{_ae_forward_padded.1} parent=1 // pred_region
      _
    $region17: #{_ae_forward_padded.1} parent=1 // pred_fallthru
      _
    // Predicated region
    $region18: #{_ae_forward_padded.1} parent=1 // pred_check
      _
    $region19: #{_ae_forward_padded.1} parent=1 // pred_check_branch
      %22 = sbr.rel (0) target = $region21
    $region20: #{_ae_forward_padded.1} parent=1 // pred_region
      _
    $region21: #{_ae_forward_padded.1} parent=1 // pred_fallthru
      _
    // Predicated region
    $region22: #{_ae_forward_padded.1} parent=1 // pred_check
      _
    $region23: #{_ae_forward_padded.1} parent=1 // pred_check_branch
      %24 = sbr.rel (0) target = $region25
    $region24: #{_ae_forward_padded.1} parent=1 // pred_region
      _
    $region25: #{_ae_forward_padded.1} parent=1 // pred_fallthru
      _
    // Predicated region
    $region26: #{_ae_forward_padded.1} parent=1 // pred_check
      _
    $region27: #{_ae_forward_padded.1} parent=1 // pred_check_branch
      %26 = sbr.rel (0) target = $region29
    $region28: #{_ae_forward_padded.1} parent=1 // pred_region
      _
    $region29: #{_ae_forward_padded.1} parent=1 // pred_fallthru
      _
    %v28 = vld [vmem:[%s0] sm:$0xff]
    %v29 = vpack.c.bf16 %v28, %v28
    %v30 = vld [vmem:[%s1] sm:$0xf]
    %v31 = vld [vmem:[%s1 + $0x4] sm:$0xf]
    %v32 = vld [vmem:[%s1 + $0x8] sm:$0xf]
    %v33 = vld [vmem:[%s1 + $0xc] sm:$0xf]
    %v34 = vld [vmem:[%s1 + $0x10] sm:$0xf]
    %v35 = vld [vmem:[%s1 + $0x14] sm:$0xf]
    %v36 = vld [vmem:[%s1 + $0x18] sm:$0xf]
    %v37 = vld [vmem:[%s1 + $0x1c] sm:$0xf]
    %v38 = vld [vmem:[%s1 + $0x20] sm:$0xf]
    %v39 = vld [vmem:[%s1 + $0x24] sm:$0xf]
    %v40 = vld [vmem:[%s1 + $0x28] sm:$0xf]
    %v41 = vld [vmem:[%s1 + $0x2c] sm:$0xf]
    %v42 = vld [vmem:[%s1 + $0x30] sm:$0xf]
    %v43 = vld [vmem:[%s1 + $0x34] sm:$0xf]
    %v44 = vld [vmem:[%s1 + $0x38] sm:$0xf]
    %v45 = vld [vmem:[%s1 + $0x3c] sm:$0xf]
    %v46 = vld [vmem:[%s2] sm:$0x1]
    %v48 = vlaneseq
    %v49 = vshrl.u32 %v48, 7
    %v50 = vsub.s32 0, %v49
    %v51 = vrot.slane %v46, %v50
    %v69 = vunpack.c.l.b16 %v30
    %v70 = vunpack.c.l.b16 %v31
    %v71 = vunpack.c.l.b16 %v32
    %v72 = vunpack.c.l.b16 %v33
    %v73 = vunpack.c.l.b16 %v34
    %v74 = vunpack.c.l.b16 %v35
    %v75 = vunpack.c.l.b16 %v36
    %v76 = vunpack.c.l.b16 %v37
    %v77 = vunpack.c.l.b16 %v38
    %v78 = vunpack.c.l.b16 %v39
    %v79 = vunpack.c.l.b16 %v40
    %v80 = vunpack.c.l.b16 %v41
    %v81 = vunpack.c.l.b16 %v42
    %v82 = vunpack.c.l.b16 %v43
    %v83 = vunpack.c.l.b16 %v44
    %v84 = vunpack.c.l.b16 %v45
    %v85 = vpack.c.b16 %v70, %v69
    %v86 = vpack.c.b16 %v72, %v71
    %v87 = vpack.c.b16 %v74, %v73
    %v88 = vpack.c.b16 %v76, %v75
    %v89 = vpack.c.b16 %v78, %v77
    %v90 = vpack.c.b16 %v80, %v79
    %v91 = vpack.c.b16 %v82, %v81
    %v92 = vpack.c.b16 %v84, %v83
    %101 = vmatprep.subr.bf16.mxu0 0
    %102 = vmatpush1.bf16.msra.mxu0 %v85
    %103 = vmatprep.subr.bf16.mxu0 0
    %104 = vmatpush1.bf16.msra.mxu0 %v86
    %105 = vmatprep.subr.bf16.mxu0 0
    %106 = vmatpush1.bf16.msra.mxu0 %v87
    %107 = vmatprep.subr.bf16.mxu0 0
    %108 = vmatpush1.bf16.msra.mxu0 %v88
    %109 = vmatprep.subr.bf16.mxu0 0
    %110 = vmatpush1.bf16.msra.mxu0 %v89
    %111 = vmatprep.subr.bf16.mxu0 0
    %112 = vmatpush1.bf16.msra.mxu0 %v90
    %113 = vmatprep.subr.bf16.mxu0 0
    %114 = vmatpush1.bf16.msra.mxu0 %v91
    %115 = vmatprep.subr.bf16.mxu0 0
    %116 = vmatpush1.bf16.msra.mxu0 %v92
    %117 = vmatprep.subr.bf16.mxu0 0
    %118 = vmatpush1.bf16.msra.mxu0 0
    %119 = vmatprep.subr.bf16.mxu0 0
    %120 = vmatpush1.bf16.msra.mxu0 0
    %121 = vmatprep.subr.bf16.mxu0 0
    %122 = vmatpush1.bf16.msra.mxu0 0
    %123 = vmatprep.subr.bf16.mxu0 0
    %124 = vmatpush1.bf16.msra.mxu0 0
    %125 = vmatprep.subr.bf16.mxu0 0
    %126 = vmatpush1.bf16.msra.mxu0 0
    %127 = vmatprep.subr.bf16.mxu0 0
    %128 = vmatpush1.bf16.msra.mxu0 0
    %129 = vmatprep.subr.bf16.mxu0 0
    %130 = vmatpush1.bf16.msra.mxu0 0
    %131 = vmatprep.subr.bf16.mxu0 0
    %132 = vmatpush1.bf16.msra.mxu0 0
    %133 = vmatprep.mubr.bf16.mxu0 0
    %134 = vmatmul.mubr.bf16.gmra.mrb[0].mxu0 %v29
    %v135 = vpop.f32.mrb[0].mxu0
    %v136 = vadd.f32 %v51, %v135
    %v137 = vpop.f32.mrb[0].mxu0
    %v138 = vpop.f32.mrb[0].mxu0
    %v139 = vpop.f32.mrb[0].mxu0
    %140 = vdwg.mxu0
    %v141 = vtanh.pop %v136
    %v142 = vpack.c.bf16 %v141, %v141
    %v143 = vld [vmem:[%s3] sm:$0xf]
    %v144 = vld [vmem:[%s3 + $0x4] sm:$0xf]
    %v145 = vld [vmem:[%s3 + $0x8] sm:$0xf]
    %v146 = vld [vmem:[%s3 + $0xc] sm:$0xf]
    %v147 = vld [vmem:[%s3 + $0x10] sm:$0xf]
    %v148 = vld [vmem:[%s3 + $0x14] sm:$0xf]
    %v149 = vld [vmem:[%s3 + $0x18] sm:$0xf]
    %v150 = vld [vmem:[%s3 + $0x1c] sm:$0xf]
    %v151 = vld [vmem:[%s4] sm:$0x1]
    %v153 = vlaneseq
    %v154 = vshrl.u32 %v153, 7
    %v155 = vsub.s32 0, %v154
    %v156 = vrot.slane %v151, %v155
    %v166 = vunpack.c.l.b16 %v143
    %v167 = vunpack.c.l.b16 %v144
    %v168 = vunpack.c.l.b16 %v145
    %v169 = vunpack.c.l.b16 %v146
    %v170 = vunpack.c.l.b16 %v147
    %v171 = vunpack.c.l.b16 %v148
    %v172 = vunpack.c.l.b16 %v149
    %v173 = vunpack.c.l.b16 %v150
    %v174 = vpack.c.b16 %v167, %v166
    %v175 = vpack.c.b16 %v169, %v168
    %v176 = vpack.c.b16 %v171, %v170
    %v177 = vpack.c.b16 %v173, %v172
    %vm182 = vcmask 523264
    %v184 = vsel %vm182, %v142, 0
    %186 = vmatprep.subr.bf16.mxu0 0
    %187 = vmatpush1.bf16.msra.mxu0 %v174
    %188 = vmatprep.subr.bf16.mxu0 0
    %189 = vmatpush1.bf16.msra.mxu0 %v175
    %190 = vmatprep.subr.bf16.mxu0 0
    %191 = vmatpush1.bf16.msra.mxu0 %v176
    %192 = vmatprep.subr.bf16.mxu0 0
    %193 = vmatpush1.bf16.msra.mxu0 %v177
    %194 = vmatprep.subr.bf16.mxu0 0
    %195 = vmatpush1.bf16.msra.mxu0 0
    %196 = vmatprep.subr.bf16.mxu0 0
    %197 = vmatpush1.bf16.msra.mxu0 0
    %198 = vmatprep.subr.bf16.mxu0 0
    %199 = vmatpush1.bf16.msra.mxu0 0
    %200 = vmatprep.subr.bf16.mxu0 0
    %201 = vmatpush1.bf16.msra.mxu0 0
    %202 = vmatprep.subr.bf16.mxu0 0
    %203 = vmatpush1.bf16.msra.mxu0 0
    %204 = vmatprep.subr.bf16.mxu0 0
    %205 = vmatpush1.bf16.msra.mxu0 0
    %206 = vmatprep.subr.bf16.mxu0 0
    %207 = vmatpush1.bf16.msra.mxu0 0
    %208 = vmatprep.subr.bf16.mxu0 0
    %209 = vmatpush1.bf16.msra.mxu0 0
    %210 = vmatprep.subr.bf16.mxu0 0
    %211 = vmatpush1.bf16.msra.mxu0 0
    %212 = vmatprep.subr.bf16.mxu0 0
    %213 = vmatpush1.bf16.msra.mxu0 0
    %214 = vmatprep.subr.bf16.mxu0 0
    %215 = vmatpush1.bf16.msra.mxu0 0
    %216 = vmatprep.subr.bf16.mxu0 0
    %217 = vmatpush1.bf16.msra.mxu0 0
    %218 = vmatprep.mubr.bf16.mxu0 0
    %219 = vmatmul.mubr.bf16.gmra.mrb[0].mxu0 %v184
    %v220 = vpop.f32.mrb[0].mxu0
    %v221 = vadd.f32 %v156, %v220
    %v222 = vpop.f32.mrb[0].mxu0
    %v223 = vpop.f32.mrb[0].mxu0
    %v224 = vpop.f32.mrb[0].mxu0
    %225 = vdwg.mxu0
    %v226 = vtanh.pop %v221
    %v227 = vpack.c.bf16 %v226, %v226
    %v228 = vld [vmem:[%s5] sm:$0xf]
    %v229 = vld [vmem:[%s5 + $0x4] sm:$0xf]
    %v230 = vld [vmem:[%s5 + $0x8] sm:$0xf]
    %v231 = vld [vmem:[%s5 + $0xc] sm:$0xf]
    %v232 = vld [vmem:[%s5 + $0x10] sm:$0xf]
    %v233 = vld [vmem:[%s5 + $0x14] sm:$0xf]
    %v234 = vld [vmem:[%s5 + $0x18] sm:$0xf]
    %v235 = vld [vmem:[%s5 + $0x1c] sm:$0xf]
    %v236 = vld [vmem:[%s6] sm:$0x1]
    %v238 = vlaneseq
    %v239 = vshrl.u32 %v238, 7
    %v240 = vsub.s32 0, %v239
    %v241 = vrot.slane %v236, %v240
    %v251 = vunpack.c.l.b16 %v228
    %v252 = vunpack.c.l.b16 %v229
    %v253 = vunpack.c.l.b16 %v230
    %v254 = vunpack.c.l.b16 %v231
    %v255 = vunpack.c.l.b16 %v232
    %v256 = vunpack.c.l.b16 %v233
    %v257 = vunpack.c.l.b16 %v234
    %v258 = vunpack.c.l.b16 %v235
    %v259 = vpack.c.b16 %v252, %v251
    %v260 = vpack.c.b16 %v254, %v253
    %v261 = vpack.c.b16 %v256, %v255
    %v262 = vpack.c.b16 %v258, %v257
    %v268 = vsel %vm182, %v227, 0
    %270 = vmatprep.subr.bf16.mxu0 0
    %271 = vmatpush1.bf16.msra.mxu0 %v259
    %272 = vmatprep.subr.bf16.mxu0 0
    %273 = vmatpush1.bf16.msra.mxu0 %v260
    %274 = vmatprep.subr.bf16.mxu0 0
    %275 = vmatpush1.bf16.msra.mxu0 %v261
    %276 = vmatprep.subr.bf16.mxu0 0
    %277 = vmatpush1.bf16.msra.mxu0 %v262
    %278 = vmatprep.subr.bf16.mxu0 0
    %279 = vmatpush1.bf16.msra.mxu0 0
    %280 = vmatprep.subr.bf16.mxu0 0
    %281 = vmatpush1.bf16.msra.mxu0 0
    %282 = vmatprep.subr.bf16.mxu0 0
    %283 = vmatpush1.bf16.msra.mxu0 0
    %284 = vmatprep.subr.bf16.mxu0 0
    %285 = vmatpush1.bf16.msra.mxu0 0
    %286 = vmatprep.subr.bf16.mxu0 0
    %287 = vmatpush1.bf16.msra.mxu0 0
    %288 = vmatprep.subr.bf16.mxu0 0
    %289 = vmatpush1.bf16.msra.mxu0 0
    %290 = vmatprep.subr.bf16.mxu0 0
    %291 = vmatpush1.bf16.msra.mxu0 0
    %292 = vmatprep.subr.bf16.mxu0 0
    %293 = vmatpush1.bf16.msra.mxu0 0
    %294 = vmatprep.subr.bf16.mxu0 0
    %295 = vmatpush1.bf16.msra.mxu0 0
    %296 = vmatprep.subr.bf16.mxu0 0
    %297 = vmatpush1.bf16.msra.mxu0 0
    %298 = vmatprep.subr.bf16.mxu0 0
    %299 = vmatpush1.bf16.msra.mxu0 0
    %300 = vmatprep.subr.bf16.mxu0 0
    %301 = vmatpush1.bf16.msra.mxu0 0
    %302 = vmatprep.mubr.bf16.mxu0 0
    %303 = vmatmul.mubr.bf16.gmra.mrb[0].mxu0 %v268
    %v304 = vpop.f32.mrb[0].mxu0
    %v305 = vadd.f32 %v241, %v304
    %v306 = vpop.f32.mrb[0].mxu0
    %v307 = vpop.f32.mrb[0].mxu0
    %v308 = vpop.f32.mrb[0].mxu0
    %309 = vdwg.mxu0
    %310 = vst [vmem:[#allocation2] sm:$0xff] %v305
    // Predicated region
    $region30: #{_ae_forward_padded.1} parent=1 // pred_check
      _
    $region31: #{_ae_forward_padded.1} parent=1 // pred_check_branch
      %312 = sbr.rel (0) target = $region33
    $region32: #{_ae_forward_padded.1} parent=1 // pred_region
      %s314 = ssub.s32 128, 128
      %315 = vsyncadd [#allocation3], %s314
      %s317 = sshll.u32 [#allocation2], 4
      %s318 = int_to_ptr.vmem [resolvable:$true] %s317
      %320 = dma.vmem_to_hbm [thread:$0]  %s318, 128, %s7, [#allocation3]
    $region33: #{_ae_forward_padded.1} parent=1 // pred_fallthru
      _
    // Predicated region
    $region34: #{_ae_forward_padded.1} parent=1 // pred_check
      _
    $region35: #{_ae_forward_padded.1} parent=1 // pred_check_branch
      %322 = sbr.rel (0) target = $region37
    $region36: #{_ae_forward_padded.1} parent=1 // pred_region
      %323 = dma.done [#allocation3], 128
    $region37: #{_ae_forward_padded.1} parent=1 // pred_fallthru
      _
    %324 = vsyncpa [#allocation3], 1

</llo_original>
